<compile_context>
chip_gen: v7x
topology: tpu7x:2x2x1
jax: 0.10.0
libtpu: 0.0.40
codegen_flags: <defaults>
</compile_context>

<pallas_src>
import jax
import jax.numpy as jnp
from jax.experimental import pallas as pl
from jax.experimental.pallas import tpu as pltpu


def _pos_embed_kernel(xt_ref, wc_ref, w2_ref, o_ref):
    # xt_ref: (1, C_in, tn)   f32 input positions in NCL layout
    # wc_ref: (E, C_in + 2)   f32 packed constants:
    #                           [:, :C_in]      = W1 * bn_scale   (BN scale folded into conv1)
    #                           [:, C_in]       = shift = (b1 - bn_mean)*bn_scale + bn_beta
    #                           [:, C_in + 1]   = b2
    # w2_ref: (E, E)          compute dtype (bf16/f32), PyTorch (out, in) layout
    # o_ref:  (1, E, tn)      f32 output tile (already in the transposed NCL layout)
    c_in = xt_ref.shape[1]
    x = xt_ref[0]                                          # (C_in, tn)

    # First 1x1 conv (tiny K) as C_in VPU FMAs, producing h^T = (W1*scale) @ x directly.
    hT = wc_ref[:, 0:1] * x[0:1, :]                        # (E, tn)
    for c in range(1, c_in):                               # static unroll, C_in ~ 2-3
        hT = hT + wc_ref[:, c:c + 1] * x[c:c + 1, :]
    hT = hT + wc_ref[:, c_in:c_in + 1]                     # folded conv1 bias + BN shift
    hT = jnp.maximum(hT, 0.0)                              # ReLU (f32 on the VPU)

    # Second 1x1 conv on the MXU: out^T = W2 @ h^T, f32 accumulation.
    outT = jnp.dot(w2_ref[...], hT.astype(w2_ref.dtype),
                   preferred_element_type=jnp.float32)
    outT = outT + wc_ref[:, c_in + 1:c_in + 2]             # conv2 bias
    o_ref[0] = outT.astype(o_ref.dtype)


def position_embedding_learned(xy, params, *, tn=1024, compute_dtype=jnp.bfloat16):
    """xy: (B, N, C_in) float32  ->  (B, embed_dim, N) float32 (matches the PyTorch output)."""
    B, N, C_in = xy.shape
    E = params["w2"].shape[0]
    eps = 1e-5

    # Fold eval-mode BatchNorm into conv1 and pack all small constants (plain-JAX glue).
    scale = params["bn_gamma"] / jnp.sqrt(params["bn_var"] + eps)            # (E,)
    shift = (params["b1"] - params["bn_mean"]) * scale + params["bn_beta"]   # (E,)
    w1s = params["w1"] * scale[:, None]                                      # (E, C_in)
    wc = jnp.concatenate([w1s, shift[:, None], params["b2"][:, None]],
                         axis=1).astype(jnp.float32)                         # (E, C_in + 2)
    w2 = params["w2"].astype(compute_dtype)                                  # (E, E)

    # Tile along N: a multiple of 128 (lane-dense), capped by the (padded) problem size.
    tn_eff = max(128, min(tn, pl.cdiv(N, 128) * 128))
    tn_eff = (tn_eff // 128) * 128
    n_pad = pl.cdiv(N, tn_eff) * tn_eff

    # Tiny input-side transpose/pad (C_in ~ 3 channels -> negligible HBM traffic vs. the output).
    xt = jnp.transpose(xy, (0, 2, 1))                                        # (B, C_in, N)
    if n_pad != N:
        xt = jnp.pad(xt, ((0, 0), (0, 0), (0, n_pad - N)))

    out = pl.pallas_call(
        _pos_embed_kernel,
        out_shape=jax.ShapeDtypeStruct((B, E, n_pad), jnp.float32),
        grid_spec=pltpu.PrefetchScalarGridSpec(
            num_scalar_prefetch=0,
            grid=(B, n_pad // tn_eff),
            in_specs=[
                pl.BlockSpec((1, C_in, tn_eff), lambda b, j: (b, 0, j)),   # input tile
                pl.BlockSpec((E, C_in + 2), lambda b, j: (0, 0)),          # packed constants (resident)
                pl.BlockSpec((E, E), lambda b, j: (0, 0)),                 # W2 (resident)
            ],
            out_specs=pl.BlockSpec((1, E, tn_eff), lambda b, j: (b, 0, j)),
        ),
        compiler_params=pltpu.CompilerParams(
            dimension_semantics=("parallel", "parallel")),
    )(xt, wc, w2)

    if n_pad != N:
        out = out[:, :, :N]
    return out


def init_params(key, input_channel, embed_dim):
    k1, k2, k3, k4, k5 = jax.random.split(key, 5)
    # Conv1d weights in PyTorch are (out, in, 1); we keep (out, in).
    w1 = 0.1 * jax.random.normal(k1, (embed_dim, input_channel), jnp.float32)
    b1 = 0.1 * jax.random.normal(k2, (embed_dim,), jnp.float32)
    w2 = 0.1 * jax.random.normal(k3, (embed_dim, embed_dim), jnp.float32)
    b2 = 0.1 * jax.random.normal(k4, (embed_dim,), jnp.float32)
    # BatchNorm1d (eval): affine params + running stats.
    bn_gamma = jnp.ones((embed_dim,), jnp.float32)
    bn_beta = jnp.zeros((embed_dim,), jnp.float32)
    bn_mean = 0.05 * jax.random.normal(k5, (embed_dim,), jnp.float32)
    bn_var = jnp.ones((embed_dim,), jnp.float32)
    return dict(w1=w1, b1=b1, w2=w2, b2=b2,
                bn_gamma=bn_gamma, bn_beta=bn_beta, bn_mean=bn_mean, bn_var=bn_var)


def _reference(xy, params):
    """Pure-JAX reference matching the PyTorch forward (eval-mode BN)."""
    eps = 1e-5
    x = jnp.transpose(xy, (0, 2, 1))                                         # (B, C_in, N)
    h = jnp.einsum("ec,bcn->ben", params["w1"], x) + params["b1"][None, :, None]
    h = (h - params["bn_mean"][None, :, None]) / jnp.sqrt(params["bn_var"][None, :, None] + eps)
    h = h * params["bn_gamma"][None, :, None] + params["bn_beta"][None, :, None]
    h = jnp.maximum(h, 0.0)
    out = jnp.einsum("fe,ben->bfn", params["w2"], h) + params["b2"][None, :, None]
    return out


if __name__ == "__main__":
    key = jax.random.PRNGKey(0)
    k_in, k_par, k_in2 = jax.random.split(key, 3)

    B, N, C_in, E = 2, 256, 3, 128
    xy = jax.random.normal(k_in, (B, N, C_in), jnp.float32)
    params = init_params(k_par, C_in, E)
    ref = _reference(xy, params)

    # Default bf16-MXU / f32-accumulate path (loosened tolerance for bf16 operands).
    out = jax.block_until_ready(position_embedding_learned(xy, params))
    assert out.shape == (B, E, N), out.shape
    assert jnp.allclose(out, ref, atol=1e-2, rtol=1e-2), float(jnp.max(jnp.abs(out - ref)))

    # f32 path with a ragged N (exercises pad + slice tail handling), tight tolerance.
    N2 = 200
    xy2 = jax.random.normal(k_in2, (1, N2, C_in), jnp.float32)
    ref2 = _reference(xy2, params)
    out2 = jax.block_until_ready(
        position_embedding_learned(xy2, params, compute_dtype=jnp.float32))
    assert out2.shape == (1, E, N2), out2.shape
    assert jnp.allclose(out2, ref2, atol=1e-4, rtol=1e-4), float(jnp.max(jnp.abs(out2 - ref2)))

    print("KERNEL_OK")
</pallas_src>

<mosaic_0001>
module attributes {stable_mosaic.version = 11 : i64} {
  func.func @_pos_embed_kernel(%arg0: i32, %arg1: i32, %arg2: memref<1x3x256xf32, #tpu.memory_space<vmem>>, %arg3: memref<128x5xf32, #tpu.memory_space<vmem>>, %arg4: memref<128x128xbf16, #tpu.memory_space<vmem>>, %arg5: memref<1x128x256xf32, #tpu.memory_space<vmem>>) attributes {dimension_semantics = [#tpu.dimension_semantics<parallel>, #tpu.dimension_semantics<parallel>], iteration_bounds = array<i64: 2, 1>, scalar_prefetch = 0 : i64, scratch_operands = 0 : i64, tpu.core_type = #tpu.core_type<tc>, window_params = [{transform_indices = @transform_0, window_bounds = array<i64: 1, 3, 256>}, {pipeline_mode = #tpu.pipeline_mode<synchronous>, transform_indices = @transform_1, window_bounds = array<i64: 128, 5>}, {pipeline_mode = #tpu.pipeline_mode<synchronous>, transform_indices = @transform_2, window_bounds = array<i64: 128, 128>}, {transform_indices = @transform_3, window_bounds = array<i64: 1, 128, 256>}]} {
    %c0 = arith.constant 0 : index
    %c0_0 = arith.constant 0 : index
    %c0_1 = arith.constant 0 : index
    %0 = vector.load %arg2[%c0, %c0_0, %c0_1] : memref<1x3x256xf32, #tpu.memory_space<vmem>>, vector<1x3x256xf32>
    %1 = vector.shape_cast %0 : vector<1x3x256xf32> to vector<3x256xf32>
    %c0_2 = arith.constant 0 : index
    %c0_3 = arith.constant 0 : index
    %2 = vector.load %arg3[%c0_2, %c0_3] : memref<128x5xf32, #tpu.memory_space<vmem>>, vector<128x1xf32>
    %3 = vector.extract_strided_slice %1 {offsets = [0, 0], sizes = [1, 256], strides = [1, 1]} : vector<3x256xf32> to vector<1x256xf32>
    %4 = vector.broadcast %2 : vector<128x1xf32> to vector<128x256xf32>
    %5 = vector.broadcast %3 : vector<1x256xf32> to vector<128x256xf32>
    %6 = arith.mulf %4, %5 : vector<128x256xf32>
    %c0_4 = arith.constant 0 : index
    %c1 = arith.constant 1 : index
    %7 = vector.load %arg3[%c0_4, %c1] : memref<128x5xf32, #tpu.memory_space<vmem>>, vector<128x1xf32>
    %8 = vector.extract_strided_slice %1 {offsets = [1, 0], sizes = [1, 256], strides = [1, 1]} : vector<3x256xf32> to vector<1x256xf32>
    %9 = vector.broadcast %7 : vector<128x1xf32> to vector<128x256xf32>
    %10 = vector.broadcast %8 : vector<1x256xf32> to vector<128x256xf32>
    %11 = arith.mulf %9, %10 : vector<128x256xf32>
    %12 = arith.addf %6, %11 : vector<128x256xf32>
    %c0_5 = arith.constant 0 : index
    %c2 = arith.constant 2 : index
    %13 = vector.load %arg3[%c0_5, %c2] : memref<128x5xf32, #tpu.memory_space<vmem>>, vector<128x1xf32>
    %14 = vector.extract_strided_slice %1 {offsets = [2, 0], sizes = [1, 256], strides = [1, 1]} : vector<3x256xf32> to vector<1x256xf32>
    %15 = vector.broadcast %13 : vector<128x1xf32> to vector<128x256xf32>
    %16 = vector.broadcast %14 : vector<1x256xf32> to vector<128x256xf32>
    %17 = arith.mulf %15, %16 : vector<128x256xf32>
    %18 = arith.addf %12, %17 : vector<128x256xf32>
    %c0_6 = arith.constant 0 : index
    %c3 = arith.constant 3 : index
    %19 = vector.load %arg3[%c0_6, %c3] : memref<128x5xf32, #tpu.memory_space<vmem>>, vector<128x1xf32>
    %20 = vector.broadcast %19 : vector<128x1xf32> to vector<128x256xf32>
    %21 = arith.addf %18, %20 : vector<128x256xf32>
    %cst = arith.constant 0.000000e+00 : f32
    %22 = vector.broadcast %cst : f32 to vector<128x256xf32>
    %23 = arith.maximumf %21, %22 : vector<128x256xf32>
    %c0_7 = arith.constant 0 : index
    %c0_8 = arith.constant 0 : index
    %24 = vector.load %arg4[%c0_7, %c0_8] : memref<128x128xbf16, #tpu.memory_space<vmem>>, vector<128x128xbf16>
    %25 = arith.truncf %23 : vector<128x256xf32> to vector<128x256xbf16>
    %cst_9 = arith.constant dense<0.000000e+00> : vector<128x256xf32>
    %26 = tpu.matmul %24, %25, %cst_9 {dimension_numbers = #tpu.dot_dimension_numbers<[1], [0], [0], [1], [0, 0, 1, 1], [], []>} : vector<128x128xbf16>, vector<128x256xbf16>, vector<128x256xf32> -> vector<128x256xf32>
    %c0_10 = arith.constant 0 : index
    %c4 = arith.constant 4 : index
    %27 = vector.load %arg3[%c0_10, %c4] : memref<128x5xf32, #tpu.memory_space<vmem>>, vector<128x1xf32>
    %28 = vector.broadcast %27 : vector<128x1xf32> to vector<128x256xf32>
    %29 = arith.addf %26, %28 : vector<128x256xf32>
    %c0_11 = arith.constant 0 : index
    %c0_12 = arith.constant 0 : index
    %c0_13 = arith.constant 0 : index
    %30 = vector.load %arg5[%c0_11, %c0_12, %c0_13] : memref<1x128x256xf32, #tpu.memory_space<vmem>>, vector<1x128x256xf32>
    %31 = vector.shape_cast %30 : vector<1x128x256xf32> to vector<128x256xf32>
    %32 = vector.shape_cast %29 : vector<128x256xf32> to vector<1x128x256xf32>
    tpu.vector_store %arg5[%c0_11, %c0_12, %c0_13], %32 {strides = array<i32>} : memref<1x128x256xf32, #tpu.memory_space<vmem>>, vector<1x128x256xf32>,
    return
  }
  func.func @transform_0(%arg0: i32, %arg1: i32) -> (i32, i32, i32) {
    %c0_i32 = arith.constant 0 : i32
    %c0_i32_0 = arith.constant 0 : i32
    return %arg0, %c0_i32, %arg1 : i32, i32, i32
  }
  func.func @transform_1(%arg0: i32, %arg1: i32) -> (i32, i32) {
    %c0_i32 = arith.constant 0 : i32
    %c0_i32_0 = arith.constant 0 : i32
    %c0_i32_1 = arith.constant 0 : i32
    return %c0_i32, %c0_i32_0 : i32, i32
  }
  func.func @transform_2(%arg0: i32, %arg1: i32) -> (i32, i32) {
    %c0_i32 = arith.constant 0 : i32
    %c0_i32_0 = arith.constant 0 : i32
    %c0_i32_1 = arith.constant 0 : i32
    return %c0_i32, %c0_i32_0 : i32, i32
  }
  func.func @transform_3(%arg0: i32, %arg1: i32) -> (i32, i32, i32) {
    %c0_i32 = arith.constant 0 : i32
    %c0_i32_0 = arith.constant 0 : i32
    return %arg0, %c0_i32, %arg1 : i32, i32, i32
  }
}

</mosaic_0001>

<llo_original>
// kernel: tpu_custom_call.1
$region0: #{tpu_custom_call.1}
  #allocation0 [shape = 'u32[]', space=smem, size = 0x4, offset = 0x4, fixed_abs, tag = 'smem constant byte address 0x4 - core index']
  #allocation1 [shape = 'u32[144,128]{1,0:T(1,128)}', space=vmem, size = 0x12000, scoped, tag = 'internal scratch']
  %s0 = inlined_call_operand.vmem [shape: f32[2,3,256], index: 0, kind: input, shape index: {}]
  %s1 = inlined_call_operand.vmem [shape: f32[128,5], index: 1, kind: input, shape index: {}]
  %s2 = inlined_call_operand.vmem [shape: bf16[128,128], index: 2, kind: input, shape index: {}]
  %s3 = inlined_call_operand.hbm [shape: f32[2,128,256], index: 3, kind: output, shape index: {}]
  %s4 = sld [smem:[#allocation0]]
  $region45: #{tpu_custom_call.1} parent=0
    _
  %s6 = ssub.s32 1, %s4
  %s7 = scalar_select 0, %s6, %s4
  $region1: #{tpu_custom_call.1} parent=0
    #allocation2 [shape = 'u8[262144]{0}', space=vmem, size = 0x40000, scoped, tag = 'output window, operand 0']
    #allocation3 [shape = 's32[2]{0}', space=sflag, size = 0x8, scoped, tag = 'scoped memory for tpu_custom_call.1']
    %8 = vsyncpa [#allocation3], 0
    %s9 = scalar_lea.sflag [#allocation3], 1
    %10 = vsyncpa %s9, 0
    loop: start=0, step=1, limit=4
    $region2: #{tpu_custom_call.1} parent=1 // loop_pre_header
      _
    $region3: #{tpu_custom_call.1} parent=1 // loop_header
      %s12 = sphi 0, %s16
      %p13 = scmp.ge.s32.totalorder %s12, 4
      %s19 = sphi 0, %s31
      %s20 = sphi 0, %s27
      %s21 = sphi 0, %s19
      %s22 = sphi 0, %s20
      %s23 = sphi 0, %s21
      %s24 = sphi 0, %s22
      %s36 = sphi 0, %s38
      %s39 = sphi 0, %s36
      %s40 = sphi 0, %s39
      %s56 = sphi 0, %s40
      %s60 = sphi 0, %s60
      %s62 = sphi 0, %s60
      %s63 = sphi 0, %s62
      %s77 = sphi 0, %s63
      %s81 = sphi 0, %s81
      %s83 = sphi 0, %s81
      %s84 = sphi 0, %s83
      %s98 = sphi 0, %s84
      %s106 = sphi 0, %s108
      %s109 = sphi 0, %s106
      %s110 = sphi 0, %s109
      %s126 = sphi 0, %s110
    $region4: #{tpu_custom_call.1} parent=1 // loop_header_branch
      %15 = sbr.rel (%p13) target = $region8
    $region5: #{tpu_custom_call.1} parent=1 // loop_body
      %s17 = ssub.s32 %s12, 1
      %s18 = ssub.s32 %s12, 2
      %s25 = sadd.s32 1, %s20
      %p26 = scmp.ge.s32.totalorder %s25, 1
      %s27 = scalar_select %p26, 0, %s25
      %s28 = sadd.s32 1, %s19
      %s29 = scalar_select %p26, %s28, %s19
      %p30 = scmp.ge.s32.totalorder %s29, 2
      %s31 = scalar_select %p30, 0, %s29
      %s32 = ssub.s32 %s19, %s31
      %s33 = ssub.s32 %s20, %s27
      %s34 = sor.u32 %s32, %s33
      %p35 = scmp.eq.s32.totalorder %s34, 0
      %s37 = sadd.s32 %s36, 1
      %s38 = scalar_select %p35, %s36, %s37
      %p41 = pneg %p35
      %p42 = scmp.eq.s32.totalorder %s12, 1
      %p43 = por %p41, %p42
      %p44 = scmp.ne.s32.totalorder %s36, %s39
      %p45 = scmp.eq.s32.totalorder %s12, 0
      %p46 = por %p44, %p45
      %p47 = scmp.ne.s32.totalorder %s36, %s39
      %p48 = scmp.eq.s32.totalorder %s17, 1
      %p49 = por %p47, %p48
      %p50 = scmp.ne.s32.totalorder %s39, %s40
      %p51 = scmp.eq.s32.totalorder %s17, 0
      %p52 = por %p50, %p51
      %p53 = scmp.ne.s32.totalorder %s39, %s40
      %p54 = scmp.eq.s32.totalorder %s18, 1
      %p55 = por %p53, %p54
      %p57 = scmp.ne.s32.totalorder %s40, %s56
      %p58 = scmp.eq.s32.totalorder %s18, 0
      %p59 = por %p57, %p58
      %s61 = sadd.s32 %s60, 1
      %p64 = scmp.eq.s32.totalorder %s12, 1
      %p65 = scmp.ne.s32.totalorder %s60, %s62
      %p66 = scmp.eq.s32.totalorder %s12, 0
      %p67 = por %p65, %p66
      %p68 = scmp.ne.s32.totalorder %s60, %s62
      %p69 = scmp.eq.s32.totalorder %s17, 1
      %p70 = por %p68, %p69
      %p71 = scmp.ne.s32.totalorder %s62, %s63
      %p72 = scmp.eq.s32.totalorder %s17, 0
      %p73 = por %p71, %p72
      %p74 = scmp.ne.s32.totalorder %s62, %s63
      %p75 = scmp.eq.s32.totalorder %s18, 1
      %p76 = por %p74, %p75
      %p78 = scmp.ne.s32.totalorder %s63, %s77
      %p79 = scmp.eq.s32.totalorder %s18, 0
      %p80 = por %p78, %p79
      %s82 = sadd.s32 %s81, 1
      %p85 = scmp.eq.s32.totalorder %s12, 1
      %p86 = scmp.ne.s32.totalorder %s81, %s83
      %p87 = scmp.eq.s32.totalorder %s12, 0
      %p88 = por %p86, %p87
      %p89 = scmp.ne.s32.totalorder %s81, %s83
      %p90 = scmp.eq.s32.totalorder %s17, 1
      %p91 = por %p89, %p90
      %p92 = scmp.ne.s32.totalorder %s83, %s84
      %p93 = scmp.eq.s32.totalorder %s17, 0
      %p94 = por %p92, %p93
      %p95 = scmp.ne.s32.totalorder %s83, %s84
      %p96 = scmp.eq.s32.totalorder %s18, 1
      %p97 = por %p95, %p96
      %p99 = scmp.ne.s32.totalorder %s84, %s98
      %p100 = scmp.eq.s32.totalorder %s18, 0
      %p101 = por %p99, %p100
      %s102 = ssub.s32 %s19, %s31
      %s103 = ssub.s32 %s20, %s27
      %s104 = sor.u32 %s102, %s103
      %p105 = scmp.eq.s32.totalorder %s104, 0
      %s107 = sadd.s32 %s106, 1
      %s108 = scalar_select %p105, %s106, %s107
      %p111 = pneg %p105
      %p112 = scmp.eq.s32.totalorder %s12, 1
      %p113 = por %p111, %p112
      %p114 = scmp.ne.s32.totalorder %s106, %s109
      %p115 = scmp.eq.s32.totalorder %s12, 0
      %p116 = por %p114, %p115
      %p117 = scmp.ne.s32.totalorder %s106, %s109
      %p118 = scmp.eq.s32.totalorder %s17, 1
      %p119 = por %p117, %p118
      %p120 = scmp.ne.s32.totalorder %s109, %s110
      %p121 = scmp.eq.s32.totalorder %s17, 0
      %p122 = por %p120, %p121
      %p123 = scmp.ne.s32.totalorder %s109, %s110
      %p124 = scmp.eq.s32.totalorder %s18, 1
      %p125 = por %p123, %p124
      %p127 = scmp.ne.s32.totalorder %s110, %s126
      %p128 = scmp.eq.s32.totalorder %s18, 0
      %p129 = por %p127, %p128
      %p130 = scmp.le.s32.totalorder 1, %s12
      %p131 = scmp.lt.s32.totalorder %s12, 3
      %p132 = pnand %p130, %p131
      %p133 = pneg %p132
      // Predicated region
      $region9: #{tpu_custom_call.1} parent=5 // pred_check
        _
      $region10: #{tpu_custom_call.1} parent=5 // pred_check_branch
        %135 = sbr.rel (%p132) target = $region12
      $region11: #{tpu_custom_call.1} parent=5 // pred_region
        %s136 = ssub.s32 %s12, 1
        // Predicated region
        $region13: #{tpu_custom_call.1} parent=11 // pred_check
          %p137 = pneg %p73
        $region14: #{tpu_custom_call.1} parent=11 // pred_check_branch
          %139 = sbr.rel (%p137) target = $region16
        $region15: #{tpu_custom_call.1} parent=11 // pred_region
          _
        $region16: #{tpu_custom_call.1} parent=11 // pred_fallthru
          _
        // Predicated region
        $region17: #{tpu_custom_call.1} parent=11 // pred_check
          %p140 = pneg %p94
        $region18: #{tpu_custom_call.1} parent=11 // pred_check_branch
          %142 = sbr.rel (%p140) target = $region20
        $region19: #{tpu_custom_call.1} parent=11 // pred_region
          _
        $region20: #{tpu_custom_call.1} parent=11 // pred_fallthru
          _
      $region12: #{tpu_custom_call.1} parent=5 // pred_fallthru
        _
      %p143 = scmp.lt.s32.totalorder %s12, 2
      // Predicated region
      $region21: #{tpu_custom_call.1} parent=5 // pred_check
        %p144 = pneg %p143
      $region22: #{tpu_custom_call.1} parent=5 // pred_check_branch
        %146 = sbr.rel (%p144) target = $region24
      $region23: #{tpu_custom_call.1} parent=5 // pred_region
        // Predicated region
        $region25: #{tpu_custom_call.1} parent=23 // pred_check
          %p147 = pneg %p46
        $region26: #{tpu_custom_call.1} parent=23 // pred_check_branch
          %149 = sbr.rel (%p147) target = $region28
        $region27: #{tpu_custom_call.1} parent=23 // pred_region
          %s150 = smul.u32 2, %s20
          %p151 = scmp.lt.s32.totalorder %s19, 1
          %s152 = scalar_select %p151, %s19, 1
          %p153 = scmp.lt.s32.totalorder %s150, 1
          %s154 = scalar_select %p153, %s150, 1
          %s155 = smul.addr %s152, 2
          %s156 = sadd.s32 %s154, %s155
          %s157 = smul.addr %s156, 4
          %s158 = scalar_lea.vmem %s0, %s157
          %s159 = smul.u32 2, %s20
        $region28: #{tpu_custom_call.1} parent=23 // pred_fallthru
          _
      $region24: #{tpu_custom_call.1} parent=5 // pred_fallthru
        _
      %p160 = scmp.le.s32.totalorder 1, %s12
      %p161 = scmp.lt.s32.totalorder %s12, 3
      %p162 = pnand %p160, %p161
      %p163 = pneg %p162
      // Predicated region
      $region29: #{tpu_custom_call.1} parent=5 // pred_check
        _
      $region30: #{tpu_custom_call.1} parent=5 // pred_check_branch
        %165 = sbr.rel (%p162) target = $region32
      $region31: #{tpu_custom_call.1} parent=5 // pred_region
        %s166 = ssub.s32 %s12, 1
        %s167 = smul.u32 2, %s22
        %p168 = scmp.lt.s32.totalorder %s21, 1
        %s169 = scalar_select %p168, %s21, 1
        %p170 = scmp.lt.s32.totalorder %s167, 1
        %s171 = scalar_select %p170, %s167, 1
        %s172 = smul.addr %s169, 2
        %s173 = sadd.s32 %s171, %s172
        %s174 = smul.addr %s173, 4
        %s175 = scalar_lea.vmem %s0, %s174
        %p176 = pneg %p52
        %p177 = pneg %p49
        %p178 = pneg %p73
        %p179 = pneg %p70
        %p180 = pneg %p94
        %p181 = pneg %p91
        %p182 = pneg %p122
        %p183 = pneg %p119
        %s184 = sand.u32 %s109, 1
        %s185 = scalar_lea.sflag [#allocation3], %s184
        %s186 = sand.u32 %s109, 1
        %s187 = smul.addr %s186, 256
        %s188 = scalar_lea.vmem [#allocation2], %s187
        %s189 = smul.u32 2, %s22
        %p190 = scmp.lt.s32.totalorder %s21, 1
        %s191 = scalar_select %p190, %s21, 1
        %p192 = scmp.lt.s32.totalorder %s189, 1
        %s193 = scalar_select %p192, %s189, 1
        %s194 = smul.addr %s191, 2
        %s195 = sadd.s32 %s193, %s194
        %s196 = smul.addr %s195, 4
        %s197 = scalar_lea.vmem %s0, %s196
        %s198 = smul.u32 2, %s22
        %s199 = smul.u32 2, %s22
        %v201 = vld [vmem:[%s197] sm:$0x77]
        %v202 = vld [vmem:[%s1] sm:$0xff]
        %v203 = vld [vmem:[%s1 + $0x8] sm:$0xff]
        %v204 = vld [vmem:[%s1 + $0x10] sm:$0xff]
        %v205 = vld [vmem:[%s1 + $0x18] sm:$0xff]
        %v206 = vld [vmem:[%s1 + $0x20] sm:$0xff]
        %v207 = vld [vmem:[%s1 + $0x28] sm:$0xff]
        %v208 = vld [vmem:[%s1 + $0x30] sm:$0xff]
        %v209 = vld [vmem:[%s1 + $0x38] sm:$0xff]
        %v210 = vld [vmem:[%s1 + $0x40] sm:$0xff]
        %v211 = vld [vmem:[%s1 + $0x48] sm:$0xff]
        %v212 = vld [vmem:[%s1 + $0x50] sm:$0xff]
        %v213 = vld [vmem:[%s1 + $0x58] sm:$0xff]
        %v214 = vld [vmem:[%s1 + $0x60] sm:$0xff]
        %v215 = vld [vmem:[%s1 + $0x68] sm:$0xff]
        %v216 = vld [vmem:[%s1 + $0x70] sm:$0xff]
        %v217 = vld [vmem:[%s1 + $0x78] sm:$0xff]
        %219 = vset.pattern.permute.xlu0 0
        %220 = vperm.xlu0 %219, %v202
        %v221 = vpop.permute.xlu0 %220
        %224 = vset.pattern.permute.xlu0 0
        %225 = vperm.xlu0 %224, %v203
        %v226 = vpop.permute.xlu0 %225
        %229 = vset.pattern.permute.xlu0 0
        %230 = vperm.xlu0 %229, %v204
        %v231 = vpop.permute.xlu0 %230
        %234 = vset.pattern.permute.xlu0 0
        %235 = vperm.xlu0 %234, %v205
        %v236 = vpop.permute.xlu0 %235
        %239 = vset.pattern.permute.xlu0 0
        %240 = vperm.xlu0 %239, %v206
        %v241 = vpop.permute.xlu0 %240
        %244 = vset.pattern.permute.xlu0 0
        %245 = vperm.xlu0 %244, %v207
        %v246 = vpop.permute.xlu0 %245
        %249 = vset.pattern.permute.xlu0 0
        %250 = vperm.xlu0 %249, %v208
        %v251 = vpop.permute.xlu0 %250
        %254 = vset.pattern.permute.xlu0 0
        %255 = vperm.xlu0 %254, %v209
        %v256 = vpop.permute.xlu0 %255
        %259 = vset.pattern.permute.xlu0 0
        %260 = vperm.xlu0 %259, %v210
        %v261 = vpop.permute.xlu0 %260
        %264 = vset.pattern.permute.xlu0 0
        %265 = vperm.xlu0 %264, %v211
        %v266 = vpop.permute.xlu0 %265
        %269 = vset.pattern.permute.xlu0 0
        %270 = vperm.xlu0 %269, %v212
        %v271 = vpop.permute.xlu0 %270
        %274 = vset.pattern.permute.xlu0 0
        %275 = vperm.xlu0 %274, %v213
        %v276 = vpop.permute.xlu0 %275
        %279 = vset.pattern.permute.xlu0 0
        %280 = vperm.xlu0 %279, %v214
        %v281 = vpop.permute.xlu0 %280
        %284 = vset.pattern.permute.xlu0 0
        %285 = vperm.xlu0 %284, %v215
        %v286 = vpop.permute.xlu0 %285
        %289 = vset.pattern.permute.xlu0 0
        %290 = vperm.xlu0 %289, %v216
        %v291 = vpop.permute.xlu0 %290
        %294 = vset.pattern.permute.xlu0 0
        %295 = vperm.xlu0 %294, %v217
        %v296 = vpop.permute.xlu0 %295
        %v299 = vlaneseq
        %v300 = vshrl.u32 %v299, 7
        %v301 = vsub.s32 0, %v300
        %v302 = vrot.slane %v201, %v301
        %v303 = vlaneseq
        %v304 = vshrl.u32 %v303, 7
        %v305 = vsub.s32 4, %v304
        %v306 = vrot.slane %v201, %v305
        %v309 = vlaneseq
        %v310 = vshrl.u32 %v309, 7
        %v311 = vsub.s32 0, %v310
        %v312 = vrot.slane %v302, %v311
        %v313 = vlaneseq
        %v314 = vshrl.u32 %v313, 7
        %v315 = vsub.s32 0, %v314
        %v316 = vrot.slane %v306, %v315
        %v317 = vmul.f32 %v221, %v312
        %v318 = vmul.f32 %v221, %v316
        %v319 = vmul.f32 %v226, %v312
        %v320 = vmul.f32 %v226, %v316
        %v321 = vmul.f32 %v231, %v312
        %v322 = vmul.f32 %v231, %v316
        %v323 = vmul.f32 %v236, %v312
        %v324 = vmul.f32 %v236, %v316
        %v325 = vmul.f32 %v241, %v312
        %v326 = vmul.f32 %v241, %v316
        %v327 = vmul.f32 %v246, %v312
        %v328 = vmul.f32 %v246, %v316
        %v329 = vmul.f32 %v251, %v312
        %v330 = vmul.f32 %v251, %v316
        %v331 = vmul.f32 %v256, %v312
        %v332 = vmul.f32 %v256, %v316
        %v333 = vmul.f32 %v261, %v312
        %v334 = vmul.f32 %v261, %v316
        %v335 = vmul.f32 %v266, %v312
        %v336 = vmul.f32 %v266, %v316
        %v337 = vmul.f32 %v271, %v312
        %v338 = vmul.f32 %v271, %v316
        %v339 = vmul.f32 %v276, %v312
        %v340 = vmul.f32 %v276, %v316
        %v341 = vmul.f32 %v281, %v312
        %v342 = vmul.f32 %v281, %v316
        %v343 = vmul.f32 %v286, %v312
        %v344 = vmul.f32 %v286, %v316
        %v345 = vmul.f32 %v291, %v312
        %v346 = vmul.f32 %v291, %v316
        %v347 = vmul.f32 %v296, %v312
        %v348 = vmul.f32 %v296, %v316
        %349 = vset.pattern.permute.xlu0 1
        %350 = vperm.xlu0 %349, %v202
        %v351 = vpop.permute.xlu0 %350
        %353 = vset.pattern.permute.xlu0 1
        %354 = vperm.xlu0 %353, %v203
        %v355 = vpop.permute.xlu0 %354
        %357 = vset.pattern.permute.xlu0 1
        %358 = vperm.xlu0 %357, %v204
        %v359 = vpop.permute.xlu0 %358
        %361 = vset.pattern.permute.xlu0 1
        %362 = vperm.xlu0 %361, %v205
        %v363 = vpop.permute.xlu0 %362
        %365 = vset.pattern.permute.xlu0 1
        %366 = vperm.xlu0 %365, %v206
        %v367 = vpop.permute.xlu0 %366
        %369 = vset.pattern.permute.xlu0 1
        %370 = vperm.xlu0 %369, %v207
        %v371 = vpop.permute.xlu0 %370
        %373 = vset.pattern.permute.xlu0 1
        %374 = vperm.xlu0 %373, %v208
        %v375 = vpop.permute.xlu0 %374
        %377 = vset.pattern.permute.xlu0 1
        %378 = vperm.xlu0 %377, %v209
        %v379 = vpop.permute.xlu0 %378
        %381 = vset.pattern.permute.xlu0 1
        %382 = vperm.xlu0 %381, %v210
        %v383 = vpop.permute.xlu0 %382
        %385 = vset.pattern.permute.xlu0 1
        %386 = vperm.xlu0 %385, %v211
        %v387 = vpop.permute.xlu0 %386
        %389 = vset.pattern.permute.xlu0 1
        %390 = vperm.xlu0 %389, %v212
        %v391 = vpop.permute.xlu0 %390
        %393 = vset.pattern.permute.xlu0 1
        %394 = vperm.xlu0 %393, %v213
        %v395 = vpop.permute.xlu0 %394
        %397 = vset.pattern.permute.xlu0 1
        %398 = vperm.xlu0 %397, %v214
        %v399 = vpop.permute.xlu0 %398
        %401 = vset.pattern.permute.xlu0 1
        %402 = vperm.xlu0 %401, %v215
        %v403 = vpop.permute.xlu0 %402
        %405 = vset.pattern.permute.xlu0 1
        %406 = vperm.xlu0 %405, %v216
        %v407 = vpop.permute.xlu0 %406
        %409 = vset.pattern.permute.xlu0 1
        %410 = vperm.xlu0 %409, %v217
        %v411 = vpop.permute.xlu0 %410
        %v413 = vlaneseq
        %v414 = vshrl.u32 %v413, 7
        %v415 = vsub.s32 1, %v414
        %v416 = vrot.slane %v201, %v415
        %v417 = vlaneseq
        %v418 = vshrl.u32 %v417, 7
        %v419 = vsub.s32 5, %v418
        %v420 = vrot.slane %v201, %v419
        %v423 = vlaneseq
        %v424 = vshrl.u32 %v423, 7
        %v425 = vsub.s32 1, %v424
        %v426 = vrot.slane %v416, %v425
        %v427 = vlaneseq
        %v428 = vshrl.u32 %v427, 7
        %v429 = vsub.s32 1, %v428
        %v430 = vrot.slane %v420, %v429
        %v431 = vmul.f32 %v351, %v426
        %v432 = vmul.f32 %v351, %v430
        %v433 = vmul.f32 %v355, %v426
        %v434 = vmul.f32 %v355, %v430
        %v435 = vmul.f32 %v359, %v426
        %v436 = vmul.f32 %v359, %v430
        %v437 = vmul.f32 %v363, %v426
        %v438 = vmul.f32 %v363, %v430
        %v439 = vmul.f32 %v367, %v426
        %v440 = vmul.f32 %v367, %v430
        %v441 = vmul.f32 %v371, %v426
        %v442 = vmul.f32 %v371, %v430
        %v443 = vmul.f32 %v375, %v426
        %v444 = vmul.f32 %v375, %v430
        %v445 = vmul.f32 %v379, %v426
        %v446 = vmul.f32 %v379, %v430
        %v447 = vmul.f32 %v383, %v426
        %v448 = vmul.f32 %v383, %v430
        %v449 = vmul.f32 %v387, %v426
        %v450 = vmul.f32 %v387, %v430
        %v451 = vmul.f32 %v391, %v426
        %v452 = vmul.f32 %v391, %v430
        %v453 = vmul.f32 %v395, %v426
        %v454 = vmul.f32 %v395, %v430
        %v455 = vmul.f32 %v399, %v426
        %v456 = vmul.f32 %v399, %v430
        %v457 = vmul.f32 %v403, %v426
        %v458 = vmul.f32 %v403, %v430
        %v459 = vmul.f32 %v407, %v426
        %v460 = vmul.f32 %v407, %v430
        %v461 = vmul.f32 %v411, %v426
        %v462 = vmul.f32 %v411, %v430
        %v463 = vadd.f32 %v317, %v431
        %v464 = vadd.f32 %v318, %v432
        %v465 = vadd.f32 %v319, %v433
        %v466 = vadd.f32 %v320, %v434
        %v467 = vadd.f32 %v321, %v435
        %v468 = vadd.f32 %v322, %v436
        %v469 = vadd.f32 %v323, %v437
        %v470 = vadd.f32 %v324, %v438
        %v471 = vadd.f32 %v325, %v439
        %v472 = vadd.f32 %v326, %v440
        %v473 = vadd.f32 %v327, %v441
        %v474 = vadd.f32 %v328, %v442
        %v475 = vadd.f32 %v329, %v443
        %v476 = vadd.f32 %v330, %v444
        %v477 = vadd.f32 %v331, %v445
        %v478 = vadd.f32 %v332, %v446
        %v479 = vadd.f32 %v333, %v447
        %v480 = vadd.f32 %v334, %v448
        %v481 = vadd.f32 %v335, %v449
        %v482 = vadd.f32 %v336, %v450
        %v483 = vadd.f32 %v337, %v451
        %v484 = vadd.f32 %v338, %v452
        %v485 = vadd.f32 %v339, %v453
        %v486 = vadd.f32 %v340, %v454
        %v487 = vadd.f32 %v341, %v455
        %v488 = vadd.f32 %v342, %v456
        %v489 = vadd.f32 %v343, %v457
        %v490 = vadd.f32 %v344, %v458
        %v491 = vadd.f32 %v345, %v459
        %v492 = vadd.f32 %v346, %v460
        %v493 = vadd.f32 %v347, %v461
        %v494 = vadd.f32 %v348, %v462
        %495 = vset.pattern.permute.xlu0 2
        %496 = vperm.xlu0 %495, %v202
        %v497 = vpop.permute.xlu0 %496
        %499 = vset.pattern.permute.xlu0 2
        %500 = vperm.xlu0 %499, %v203
        %v501 = vpop.permute.xlu0 %500
        %503 = vset.pattern.permute.xlu0 2
        %504 = vperm.xlu0 %503, %v204
        %v505 = vpop.permute.xlu0 %504
        %507 = vset.pattern.permute.xlu0 2
        %508 = vperm.xlu0 %507, %v205
        %v509 = vpop.permute.xlu0 %508
        %511 = vset.pattern.permute.xlu0 2
        %512 = vperm.xlu0 %511, %v206
        %v513 = vpop.permute.xlu0 %512
        %515 = vset.pattern.permute.xlu0 2
        %516 = vperm.xlu0 %515, %v207
        %v517 = vpop.permute.xlu0 %516
        %519 = vset.pattern.permute.xlu0 2
        %520 = vperm.xlu0 %519, %v208
        %v521 = vpop.permute.xlu0 %520
        %523 = vset.pattern.permute.xlu0 2
        %524 = vperm.xlu0 %523, %v209
        %v525 = vpop.permute.xlu0 %524
        %527 = vset.pattern.permute.xlu0 2
        %528 = vperm.xlu0 %527, %v210
        %v529 = vpop.permute.xlu0 %528
        %531 = vset.pattern.permute.xlu0 2
        %532 = vperm.xlu0 %531, %v211
        %v533 = vpop.permute.xlu0 %532
        %535 = vset.pattern.permute.xlu0 2
        %536 = vperm.xlu0 %535, %v212
        %v537 = vpop.permute.xlu0 %536
        %539 = vset.pattern.permute.xlu0 2
        %540 = vperm.xlu0 %539, %v213
        %v541 = vpop.permute.xlu0 %540
        %543 = vset.pattern.permute.xlu0 2
        %544 = vperm.xlu0 %543, %v214
        %v545 = vpop.permute.xlu0 %544
        %547 = vset.pattern.permute.xlu0 2
        %548 = vperm.xlu0 %547, %v215
        %v549 = vpop.permute.xlu0 %548
        %551 = vset.pattern.permute.xlu0 2
        %552 = vperm.xlu0 %551, %v216
        %v553 = vpop.permute.xlu0 %552
        %555 = vset.pattern.permute.xlu0 2
        %556 = vperm.xlu0 %555, %v217
        %v557 = vpop.permute.xlu0 %556
        %v559 = vlaneseq
        %v560 = vshrl.u32 %v559, 7
        %v561 = vsub.s32 2, %v560
        %v562 = vrot.slane %v201, %v561
        %v563 = vlaneseq
        %v564 = vshrl.u32 %v563, 7
        %v565 = vsub.s32 6, %v564
        %v566 = vrot.slane %v201, %v565
        %v569 = vlaneseq
        %v570 = vshrl.u32 %v569, 7
        %v571 = vsub.s32 2, %v570
        %v572 = vrot.slane %v562, %v571
        %v573 = vlaneseq
        %v574 = vshrl.u32 %v573, 7
        %v575 = vsub.s32 2, %v574
        %v576 = vrot.slane %v566, %v575
        %v577 = vmul.f32 %v497, %v572
        %v578 = vmul.f32 %v497, %v576
        %v579 = vmul.f32 %v501, %v572
        %v580 = vmul.f32 %v501, %v576
        %v581 = vmul.f32 %v505, %v572
        %v582 = vmul.f32 %v505, %v576
        %v583 = vmul.f32 %v509, %v572
        %v584 = vmul.f32 %v509, %v576
        %v585 = vmul.f32 %v513, %v572
        %v586 = vmul.f32 %v513, %v576
        %v587 = vmul.f32 %v517, %v572
        %v588 = vmul.f32 %v517, %v576
        %v589 = vmul.f32 %v521, %v572
        %v590 = vmul.f32 %v521, %v576
        %v591 = vmul.f32 %v525, %v572
        %v592 = vmul.f32 %v525, %v576
        %v593 = vmul.f32 %v529, %v572
        %v594 = vmul.f32 %v529, %v576
        %v595 = vmul.f32 %v533, %v572
        %v596 = vmul.f32 %v533, %v576
        %v597 = vmul.f32 %v537, %v572
        %v598 = vmul.f32 %v537, %v576
        %v599 = vmul.f32 %v541, %v572
        %v600 = vmul.f32 %v541, %v576
        %v601 = vmul.f32 %v545, %v572
        %v602 = vmul.f32 %v545, %v576
        %v603 = vmul.f32 %v549, %v572
        %v604 = vmul.f32 %v549, %v576
        %v605 = vmul.f32 %v553, %v572
        %v606 = vmul.f32 %v553, %v576
        %v607 = vmul.f32 %v557, %v572
        %v608 = vmul.f32 %v557, %v576
        %v609 = vadd.f32 %v463, %v577
        %v610 = vadd.f32 %v464, %v578
        %v611 = vadd.f32 %v465, %v579
        %v612 = vadd.f32 %v466, %v580
        %v613 = vadd.f32 %v467, %v581
        %v614 = vadd.f32 %v468, %v582
        %v615 = vadd.f32 %v469, %v583
        %v616 = vadd.f32 %v470, %v584
        %v617 = vadd.f32 %v471, %v585
        %v618 = vadd.f32 %v472, %v586
        %v619 = vadd.f32 %v473, %v587
        %v620 = vadd.f32 %v474, %v588
        %v621 = vadd.f32 %v475, %v589
        %v622 = vadd.f32 %v476, %v590
        %v623 = vadd.f32 %v477, %v591
        %v624 = vadd.f32 %v478, %v592
        %v625 = vadd.f32 %v479, %v593
        %v626 = vadd.f32 %v480, %v594
        %v627 = vadd.f32 %v481, %v595
        %v628 = vadd.f32 %v482, %v596
        %v629 = vadd.f32 %v483, %v597
        %v630 = vadd.f32 %v484, %v598
        %v631 = vadd.f32 %v485, %v599
        %v632 = vadd.f32 %v486, %v600
        %v633 = vadd.f32 %v487, %v601
        %v634 = vadd.f32 %v488, %v602
        %v635 = vadd.f32 %v489, %v603
        %v636 = vadd.f32 %v490, %v604
        %v637 = vadd.f32 %v491, %v605
        %v638 = vadd.f32 %v492, %v606
        %v639 = vadd.f32 %v493, %v607
        %v640 = vadd.f32 %v494, %v608
        %641 = vset.pattern.permute.xlu0 3
        %642 = vperm.xlu0 %641, %v202
        %v643 = vpop.permute.xlu0 %642
        %645 = vset.pattern.permute.xlu0 3
        %646 = vperm.xlu0 %645, %v203
        %v647 = vpop.permute.xlu0 %646
        %649 = vset.pattern.permute.xlu0 3
        %650 = vperm.xlu0 %649, %v204
        %v651 = vpop.permute.xlu0 %650
        %653 = vset.pattern.permute.xlu0 3
        %654 = vperm.xlu0 %653, %v205
        %v655 = vpop.permute.xlu0 %654
        %657 = vset.pattern.permute.xlu0 3
        %658 = vperm.xlu0 %657, %v206
        %v659 = vpop.permute.xlu0 %658
        %661 = vset.pattern.permute.xlu0 3
        %662 = vperm.xlu0 %661, %v207
        %v663 = vpop.permute.xlu0 %662
        %665 = vset.pattern.permute.xlu0 3
        %666 = vperm.xlu0 %665, %v208
        %v667 = vpop.permute.xlu0 %666
        %669 = vset.pattern.permute.xlu0 3
        %670 = vperm.xlu0 %669, %v209
        %v671 = vpop.permute.xlu0 %670
        %673 = vset.pattern.permute.xlu0 3
        %674 = vperm.xlu0 %673, %v210
        %v675 = vpop.permute.xlu0 %674
        %677 = vset.pattern.permute.xlu0 3
        %678 = vperm.xlu0 %677, %v211
        %v679 = vpop.permute.xlu0 %678
        %681 = vset.pattern.permute.xlu0 3
        %682 = vperm.xlu0 %681, %v212
        %v683 = vpop.permute.xlu0 %682
        %685 = vset.pattern.permute.xlu0 3
        %686 = vperm.xlu0 %685, %v213
        %v687 = vpop.permute.xlu0 %686
        %689 = vset.pattern.permute.xlu0 3
        %690 = vperm.xlu0 %689, %v214
        %v691 = vpop.permute.xlu0 %690
        %693 = vset.pattern.permute.xlu0 3
        %694 = vperm.xlu0 %693, %v215
        %v695 = vpop.permute.xlu0 %694
        %697 = vset.pattern.permute.xlu0 3
        %698 = vperm.xlu0 %697, %v216
        %v699 = vpop.permute.xlu0 %698
        %701 = vset.pattern.permute.xlu0 3
        %702 = vperm.xlu0 %701, %v217
        %v703 = vpop.permute.xlu0 %702
        %v705 = vadd.f32 %v609, %v643
        %v706 = vadd.f32 %v610, %v643
        %v707 = vadd.f32 %v611, %v647
        %v708 = vadd.f32 %v612, %v647
        %v709 = vadd.f32 %v613, %v651
        %v710 = vadd.f32 %v614, %v651
        %v711 = vadd.f32 %v615, %v655
        %v712 = vadd.f32 %v616, %v655
        %v713 = vadd.f32 %v617, %v659
        %v714 = vadd.f32 %v618, %v659
        %v715 = vadd.f32 %v619, %v663
        %v716 = vadd.f32 %v620, %v663
        %v717 = vadd.f32 %v621, %v667
        %v718 = vadd.f32 %v622, %v667
        %v719 = vadd.f32 %v623, %v671
        %v720 = vadd.f32 %v624, %v671
        %v721 = vadd.f32 %v625, %v675
        %v722 = vadd.f32 %v626, %v675
        %v723 = vadd.f32 %v627, %v679
        %v724 = vadd.f32 %v628, %v679
        %v725 = vadd.f32 %v629, %v683
        %v726 = vadd.f32 %v630, %v683
        %v727 = vadd.f32 %v631, %v687
        %v728 = vadd.f32 %v632, %v687
        %v729 = vadd.f32 %v633, %v691
        %v730 = vadd.f32 %v634, %v691
        %v731 = vadd.f32 %v635, %v695
        %v732 = vadd.f32 %v636, %v695
        %v733 = vadd.f32 %v637, %v699
        %v734 = vadd.f32 %v638, %v699
        %v735 = vadd.f32 %v639, %v703
        %v736 = vadd.f32 %v640, %v703
        %v737 = vmax.f32 %v705, 0.0
        %v738 = vmax.f32 %v706, 0.0
        %v739 = vmax.f32 %v707, 0.0
        %v740 = vmax.f32 %v708, 0.0
        %v741 = vmax.f32 %v709, 0.0
        %v742 = vmax.f32 %v710, 0.0
        %v743 = vmax.f32 %v711, 0.0
        %v744 = vmax.f32 %v712, 0.0
        %v745 = vmax.f32 %v713, 0.0
        %v746 = vmax.f32 %v714, 0.0
        %v747 = vmax.f32 %v715, 0.0
        %v748 = vmax.f32 %v716, 0.0
        %v749 = vmax.f32 %v717, 0.0
        %v750 = vmax.f32 %v718, 0.0
        %v751 = vmax.f32 %v719, 0.0
        %v752 = vmax.f32 %v720, 0.0
        %v753 = vmax.f32 %v721, 0.0
        %v754 = vmax.f32 %v722, 0.0
        %v755 = vmax.f32 %v723, 0.0
        %v756 = vmax.f32 %v724, 0.0
        %v757 = vmax.f32 %v725, 0.0
        %v758 = vmax.f32 %v726, 0.0
        %v759 = vmax.f32 %v727, 0.0
        %v760 = vmax.f32 %v728, 0.0
        %v761 = vmax.f32 %v729, 0.0
        %v762 = vmax.f32 %v730, 0.0
        %v763 = vmax.f32 %v731, 0.0
        %v764 = vmax.f32 %v732, 0.0
        %v765 = vmax.f32 %v733, 0.0
        %v766 = vmax.f32 %v734, 0.0
        %v767 = vmax.f32 %v735, 0.0
        %v768 = vmax.f32 %v736, 0.0
        %v769 = vld [vmem:[%s2] sm:$0xf]
        %v770 = vld [vmem:[%s2 + $0x4] sm:$0xf]
        %v771 = vld [vmem:[%s2 + $0x8] sm:$0xf]
        %v772 = vld [vmem:[%s2 + $0xc] sm:$0xf]
        %v773 = vld [vmem:[%s2 + $0x10] sm:$0xf]
        %v774 = vld [vmem:[%s2 + $0x14] sm:$0xf]
        %v775 = vld [vmem:[%s2 + $0x18] sm:$0xf]
        %v776 = vld [vmem:[%s2 + $0x1c] sm:$0xf]
        %v777 = vld [vmem:[%s2 + $0x20] sm:$0xf]
        %v778 = vld [vmem:[%s2 + $0x24] sm:$0xf]
        %v779 = vld [vmem:[%s2 + $0x28] sm:$0xf]
        %v780 = vld [vmem:[%s2 + $0x2c] sm:$0xf]
        %v781 = vld [vmem:[%s2 + $0x30] sm:$0xf]
        %v782 = vld [vmem:[%s2 + $0x34] sm:$0xf]
        %v783 = vld [vmem:[%s2 + $0x38] sm:$0xf]
        %v784 = vld [vmem:[%s2 + $0x3c] sm:$0xf]
        %v785 = vpack.c.bf16 %v739, %v737
        %v786 = vpack.c.bf16 %v740, %v738
        %v787 = vpack.c.bf16 %v743, %v741
        %v788 = vpack.c.bf16 %v744, %v742
        %v789 = vpack.c.bf16 %v747, %v745
        %v790 = vpack.c.bf16 %v748, %v746
        %v791 = vpack.c.bf16 %v751, %v749
        %v792 = vpack.c.bf16 %v752, %v750
        %v793 = vpack.c.bf16 %v755, %v753
        %v794 = vpack.c.bf16 %v756, %v754
        %v795 = vpack.c.bf16 %v759, %v757
        %v796 = vpack.c.bf16 %v760, %v758
        %v797 = vpack.c.bf16 %v763, %v761
        %v798 = vpack.c.bf16 %v764, %v762
        %v799 = vpack.c.bf16 %v767, %v765
        %v800 = vpack.c.bf16 %v768, %v766
        %801 = vset.pattern.permute.xlu0 4
        %802 = vperm.xlu0 %801, %v202
        %v803 = vpop.permute.xlu0 %802
        %805 = vset.pattern.permute.xlu0 4
        %806 = vperm.xlu0 %805, %v203
        %v807 = vpop.permute.xlu0 %806
        %809 = vset.pattern.permute.xlu0 4
        %810 = vperm.xlu0 %809, %v204
        %v811 = vpop.permute.xlu0 %810
        %813 = vset.pattern.permute.xlu0 4
        %814 = vperm.xlu0 %813, %v205
        %v815 = vpop.permute.xlu0 %814
        %817 = vset.pattern.permute.xlu0 4
        %818 = vperm.xlu0 %817, %v206
        %v819 = vpop.permute.xlu0 %818
        %821 = vset.pattern.permute.xlu0 4
        %822 = vperm.xlu0 %821, %v207
        %v823 = vpop.permute.xlu0 %822
        %825 = vset.pattern.permute.xlu0 4
        %826 = vperm.xlu0 %825, %v208
        %v827 = vpop.permute.xlu0 %826
        %829 = vset.pattern.permute.xlu0 4
        %830 = vperm.xlu0 %829, %v209
        %v831 = vpop.permute.xlu0 %830
        %833 = vset.pattern.permute.xlu0 4
        %834 = vperm.xlu0 %833, %v210
        %v835 = vpop.permute.xlu0 %834
        %837 = vset.pattern.permute.xlu0 4
        %838 = vperm.xlu0 %837, %v211
        %v839 = vpop.permute.xlu0 %838
        %841 = vset.pattern.permute.xlu0 4
        %842 = vperm.xlu0 %841, %v212
        %v843 = vpop.permute.xlu0 %842
        %845 = vset.pattern.permute.xlu0 4
        %846 = vperm.xlu0 %845, %v213
        %v847 = vpop.permute.xlu0 %846
        %849 = vset.pattern.permute.xlu0 4
        %850 = vperm.xlu0 %849, %v214
        %v851 = vpop.permute.xlu0 %850
        %853 = vset.pattern.permute.xlu0 4
        %854 = vperm.xlu0 %853, %v215
        %v855 = vpop.permute.xlu0 %854
        %857 = vset.pattern.permute.xlu0 4
        %858 = vperm.xlu0 %857, %v216
        %v859 = vpop.permute.xlu0 %858
        %861 = vset.pattern.permute.xlu0 4
        %862 = vperm.xlu0 %861, %v217
        %v863 = vpop.permute.xlu0 %862
        %v881 = vunpack.c.l.b16 %v769
        %v882 = vunpack.c.l.b16 %v770
        %v883 = vunpack.c.l.b16 %v771
        %v884 = vunpack.c.l.b16 %v772
        %v885 = vunpack.c.l.b16 %v773
        %v886 = vunpack.c.l.b16 %v774
        %v887 = vunpack.c.l.b16 %v775
        %v888 = vunpack.c.l.b16 %v776
        %v889 = vunpack.c.l.b16 %v777
        %v890 = vunpack.c.l.b16 %v778
        %v891 = vunpack.c.l.b16 %v779
        %v892 = vunpack.c.l.b16 %v780
        %v893 = vunpack.c.l.b16 %v781
        %v894 = vunpack.c.l.b16 %v782
        %v895 = vunpack.c.l.b16 %v783
        %v896 = vunpack.c.l.b16 %v784
        %v897 = vpack.c.b16 %v882, %v881
        %v898 = vpack.c.b16 %v884, %v883
        %v899 = vpack.c.b16 %v886, %v885
        %v900 = vpack.c.b16 %v888, %v887
        %v901 = vpack.c.b16 %v890, %v889
        %v902 = vpack.c.b16 %v892, %v891
        %v903 = vpack.c.b16 %v894, %v893
        %v904 = vpack.c.b16 %v896, %v895
        %913 = vmatprep.subr.bf16.mxu0 %v786
        %914 = vmatpush1.bf16.msra.mxu0 %v785
        %915 = vmatprep.subr.bf16.mxu0 %v788
        %916 = vmatpush1.bf16.msra.mxu0 %v787
        %917 = vmatprep.subr.bf16.mxu0 %v790
        %918 = vmatpush1.bf16.msra.mxu0 %v789
        %919 = vmatprep.subr.bf16.mxu0 %v792
        %920 = vmatpush1.bf16.msra.mxu0 %v791
        %921 = vmatprep.subr.bf16.mxu0 %v794
        %922 = vmatpush1.bf16.msra.mxu0 %v793
        %923 = vmatprep.subr.bf16.mxu0 %v796
        %924 = vmatpush1.bf16.msra.mxu0 %v795
        %925 = vmatprep.subr.bf16.mxu0 %v798
        %926 = vmatpush1.bf16.msra.mxu0 %v797
        %927 = vmatprep.subr.bf16.mxu0 %v800
        %928 = vmatpush1.bf16.msra.mxu0 %v799
        %929 = vmatprep.subr.bf16.mxu0 0
        %930 = vmatpush1.bf16.msra.mxu0 0
        %931 = vmatprep.subr.bf16.mxu0 0
        %932 = vmatpush1.bf16.msra.mxu0 0
        %933 = vmatprep.subr.bf16.mxu0 0
        %934 = vmatpush1.bf16.msra.mxu0 0
        %935 = vmatprep.subr.bf16.mxu0 0
        %936 = vmatpush1.bf16.msra.mxu0 0
        %937 = vmatprep.subr.bf16.mxu0 0
        %938 = vmatpush1.bf16.msra.mxu0 0
        %939 = vmatprep.subr.bf16.mxu0 0
        %940 = vmatpush1.bf16.msra.mxu0 0
        %941 = vmatprep.subr.bf16.mxu0 0
        %942 = vmatpush1.bf16.msra.mxu0 0
        %943 = vmatprep.subr.bf16.mxu0 0
        %944 = vmatpush1.bf16.msra.mxu0 0
        %945 = vmatprep.mubr.bf16.mxu0 0
        %946 = vmatmul.mubr.bf16.gmra.mrb[0].mxu0 %v897
        %v947 = vpop.f32.mrb[0].mxu0
        %v948 = vadd.f32 %v803, %v947
        %v949 = vpop.f32.mrb[0].mxu0
        %v950 = vadd.f32 %v803, %v949
        %v951 = vpop.f32.mrb[0].mxu0
        %v952 = vadd.f32 %v807, %v951
        %v953 = vpop.f32.mrb[0].mxu0
        %v954 = vadd.f32 %v807, %v953
        %955 = vmatprep.mubr.bf16.mxu0 0
        %956 = vmatmul.mubr.bf16.gmra.mrb[0].mxu0 %v898
        %v957 = vpop.f32.mrb[0].mxu0
        %v958 = vadd.f32 %v811, %v957
        %v959 = vpop.f32.mrb[0].mxu0
        %v960 = vadd.f32 %v811, %v959
        %v961 = vpop.f32.mrb[0].mxu0
        %v962 = vadd.f32 %v815, %v961
        %v963 = vpop.f32.mrb[0].mxu0
        %v964 = vadd.f32 %v815, %v963
        %965 = vmatprep.mubr.bf16.mxu0 0
        %966 = vmatmul.mubr.bf16.gmra.mrb[0].mxu0 %v899
        %v967 = vpop.f32.mrb[0].mxu0
        %v968 = vadd.f32 %v819, %v967
        %v969 = vpop.f32.mrb[0].mxu0
        %v970 = vadd.f32 %v819, %v969
        %v971 = vpop.f32.mrb[0].mxu0
        %v972 = vadd.f32 %v823, %v971
        %v973 = vpop.f32.mrb[0].mxu0
        %v974 = vadd.f32 %v823, %v973
        %975 = vmatprep.mubr.bf16.mxu0 0
        %976 = vmatmul.mubr.bf16.gmra.mrb[0].mxu0 %v900
        %v977 = vpop.f32.mrb[0].mxu0
        %v978 = vadd.f32 %v827, %v977
        %v979 = vpop.f32.mrb[0].mxu0
        %v980 = vadd.f32 %v827, %v979
        %v981 = vpop.f32.mrb[0].mxu0
        %v982 = vadd.f32 %v831, %v981
        %v983 = vpop.f32.mrb[0].mxu0
        %v984 = vadd.f32 %v831, %v983
        %985 = vmatprep.mubr.bf16.mxu0 0
        %986 = vmatmul.mubr.bf16.gmra.mrb[0].mxu0 %v901
        %v987 = vpop.f32.mrb[0].mxu0
        %v988 = vadd.f32 %v835, %v987
        %v989 = vpop.f32.mrb[0].mxu0
        %v990 = vadd.f32 %v835, %v989
        %v991 = vpop.f32.mrb[0].mxu0
        %v992 = vadd.f32 %v839, %v991
        %v993 = vpop.f32.mrb[0].mxu0
        %v994 = vadd.f32 %v839, %v993
        %995 = vmatprep.mubr.bf16.mxu0 0
        %996 = vmatmul.mubr.bf16.gmra.mrb[0].mxu0 %v902
        %v997 = vpop.f32.mrb[0].mxu0
        %v998 = vadd.f32 %v843, %v997
        %v999 = vpop.f32.mrb[0].mxu0
        %v1000 = vadd.f32 %v843, %v999
        %v1001 = vpop.f32.mrb[0].mxu0
        %v1002 = vadd.f32 %v847, %v1001
        %v1003 = vpop.f32.mrb[0].mxu0
        %v1004 = vadd.f32 %v847, %v1003
        %1005 = vmatprep.mubr.bf16.mxu0 0
        %1006 = vmatmul.mubr.bf16.gmra.mrb[0].mxu0 %v903
        %v1007 = vpop.f32.mrb[0].mxu0
        %v1008 = vadd.f32 %v851, %v1007
        %v1009 = vpop.f32.mrb[0].mxu0
        %v1010 = vadd.f32 %v851, %v1009
        %v1011 = vpop.f32.mrb[0].mxu0
        %v1012 = vadd.f32 %v855, %v1011
        %v1013 = vpop.f32.mrb[0].mxu0
        %v1014 = vadd.f32 %v855, %v1013
        %1015 = vmatprep.mubr.bf16.mxu0 0
        %1016 = vmatmul.mubr.bf16.gmra.mrb[0].mxu0 %v904
        %v1017 = vpop.f32.mrb[0].mxu0
        %v1018 = vadd.f32 %v859, %v1017
        %v1019 = vpop.f32.mrb[0].mxu0
        %v1020 = vadd.f32 %v859, %v1019
        %v1021 = vpop.f32.mrb[0].mxu0
        %v1022 = vadd.f32 %v863, %v1021
        %v1023 = vpop.f32.mrb[0].mxu0
        %v1024 = vadd.f32 %v863, %v1023
        %1025 = vdwg.mxu0
        %1026 = vst [vmem:[%s188] sm:$0xff] %v948
        %1027 = vst [vmem:[%s188 + $0x8] sm:$0xff] %v950
        %1028 = vst [vmem:[%s188 + $0x10] sm:$0xff] %v952
        %1029 = vst [vmem:[%s188 + $0x18] sm:$0xff] %v954
        %1030 = vst [vmem:[%s188 + $0x20] sm:$0xff] %v958
        %1031 = vst [vmem:[%s188 + $0x28] sm:$0xff] %v960
        %1032 = vst [vmem:[%s188 + $0x30] sm:$0xff] %v962
        %1033 = vst [vmem:[%s188 + $0x38] sm:$0xff] %v964
        %1034 = vst [vmem:[%s188 + $0x40] sm:$0xff] %v968
        %1035 = vst [vmem:[%s188 + $0x48] sm:$0xff] %v970
        %1036 = vst [vmem:[%s188 + $0x50] sm:$0xff] %v972
        %1037 = vst [vmem:[%s188 + $0x58] sm:$0xff] %v974
        %1038 = vst [vmem:[%s188 + $0x60] sm:$0xff] %v978
        %1039 = vst [vmem:[%s188 + $0x68] sm:$0xff] %v980
        %1040 = vst [vmem:[%s188 + $0x70] sm:$0xff] %v982
        %1041 = vst [vmem:[%s188 + $0x78] sm:$0xff] %v984
        %1042 = vst [vmem:[%s188 + $0x80] sm:$0xff] %v988
        %1043 = vst [vmem:[%s188 + $0x88] sm:$0xff] %v990
        %1044 = vst [vmem:[%s188 + $0x90] sm:$0xff] %v992
        %1045 = vst [vmem:[%s188 + $0x98] sm:$0xff] %v994
        %1046 = vst [vmem:[%s188 + $0xa0] sm:$0xff] %v998
        %1047 = vst [vmem:[%s188 + $0xa8] sm:$0xff] %v1000
        %1048 = vst [vmem:[%s188 + $0xb0] sm:$0xff] %v1002
        %1049 = vst [vmem:[%s188 + $0xb8] sm:$0xff] %v1004
        %1050 = vst [vmem:[%s188 + $0xc0] sm:$0xff] %v1008
        %1051 = vst [vmem:[%s188 + $0xc8] sm:$0xff] %v1010
        %1052 = vst [vmem:[%s188 + $0xd0] sm:$0xff] %v1012
        %1053 = vst [vmem:[%s188 + $0xd8] sm:$0xff] %v1014
        %1054 = vst [vmem:[%s188 + $0xe0] sm:$0xff] %v1018
        %1055 = vst [vmem:[%s188 + $0xe8] sm:$0xff] %v1020
        %1056 = vst [vmem:[%s188 + $0xf0] sm:$0xff] %v1022
        %1057 = vst [vmem:[%s188 + $0xf8] sm:$0xff] %v1024
        %s1058 = sand.u32 %s109, 1
        %s1059 = scalar_lea.sflag [#allocation3], %s1058
        %s1060 = sand.u32 %s109, 1
        %s1061 = smul.addr %s1060, 256
        %s1062 = scalar_lea.vmem [#allocation2], %s1061
        // Predicated region
        $region33: #{tpu_custom_call.1} parent=31 // pred_check
          %p1063 = pneg %p119
        $region34: #{tpu_custom_call.1} parent=31 // pred_check_branch
          %1065 = sbr.rel (%p1063) target = $region36
        $region35: #{tpu_custom_call.1} parent=31 // pred_region
          %s1066 = smul.u32 2, %s22
          %s1068 = ssub.s32 4096, 4096
          %1069 = vsyncadd %s1059, %s1068
          %s1070 = smul.addr %s21, 32
          %s1071 = sadd.s32 %s1066, %s1070
          %s1072 = smul.addr %s1071, 128
          %s1073 = scalar_lea.hbm %s3, %s1072
          %s1074 = sshll.u32 %s1062, 4
          %s1075 = int_to_ptr.vmem [resolvable:$true] %s1074
          %1080 = dma.vmem_to_hbm [thread:$0]  %s1075, 4096, %s1073, %s1059, 256, 256, 16
        $region36: #{tpu_custom_call.1} parent=31 // pred_fallthru
          _
      $region32: #{tpu_custom_call.1} parent=5 // pred_fallthru
        _
      %p1081 = scmp.le.s32.totalorder 2, %s12
      // Predicated region
      $region37: #{tpu_custom_call.1} parent=5 // pred_check
        %p1082 = pneg %p1081
      $region38: #{tpu_custom_call.1} parent=5 // pred_check_branch
        %1084 = sbr.rel (%p1082) target = $region40
      $region39: #{tpu_custom_call.1} parent=5 // pred_region
        %s1085 = ssub.s32 %s12, 2
        // Predicated region
        $region41: #{tpu_custom_call.1} parent=39 // pred_check
          %p1086 = pneg %p125
        $region42: #{tpu_custom_call.1} parent=39 // pred_check_branch
          %1088 = sbr.rel (%p1086) target = $region44
        $region43: #{tpu_custom_call.1} parent=39 // pred_region
          %s1089 = sand.u32 %s110, 1
          %s1090 = scalar_lea.sflag [#allocation3], %s1089
          %s1091 = sand.u32 %s110, 1
          %s1092 = smul.addr %s1091, 256
          %s1093 = scalar_lea.vmem [#allocation2], %s1092
          %1094 = dma.done %s1090, 4096
        $region44: #{tpu_custom_call.1} parent=39 // pred_fallthru
          _
      $region40: #{tpu_custom_call.1} parent=5 // pred_fallthru
        _
    $region6: #{tpu_custom_call.1} parent=1 // loop_footer
      %s16 = sadd.s32 1, %s12
    $region7: #{tpu_custom_call.1} parent=1 // loop_footer_branch
      %11 = sbr.rel target = $region3
    $region8: #{tpu_custom_call.1} parent=1 // loop_exit
      _
    %1095 = vsyncpa [#allocation3], 1
    %s1096 = scalar_lea.sflag [#allocation3], 1
    %1097 = vsyncpa %s1096, 1

</llo_original>
